<compile_context>
chip_gen: v6e
topology: v6e:2x2x1
jax: 0.10.0
libtpu: 0.0.40
codegen_flags: <defaults>
</compile_context>

<pallas_src>
import functools
import math

import jax
import jax.numpy as jnp
import numpy as np
from jax.experimental import pallas as pl
from jax.experimental.pallas import tpu as pltpu

PAD = 0

_SUBLANE = {4: 8, 2: 16, 1: 32}   # sublane packing per itemsize (f32 / bf16 / int8-fp8)


def _default_block_bytes():
    """~HBM-roofline log-prob block size per TPU generation (Pallas double-buffers it)."""
    try:
        kind = jax.devices()[0].device_kind.lower()
    except Exception:
        kind = ""
    if "v7" in kind:
        return 4 << 20   # 3.2 TB/s HBM: 1 MiB blocks leave 35-50% on the table; 2x4 MiB << 32 MiB scoped
    return 2 << 20       # v6e (~86% roofline at 2-4 MiB) and v5e (16 MiB default scoped VMEM)


def _ctx_lm_gather_kernel(tgt_ref, lp_ref, sel_ref, *, v_tile):
    """Grid = (window blocks G ["parallel"], vocab tiles GV ["arbitrary" reduction]).

    tgt_ref: [1, B, W*D] i32  targets for the W fused windows (-1 = ignore sentinel)
    lp_ref : [B, W*D, VT]     log-prob stream for those positions, vocab tile j
    sel_ref: [1, B, W*D] f32  gathered log-prob per position (0 where ignored);
                              block resident across vocab tiles, accumulated in f32.
    """
    j = pl.program_id(1)

    @pl.when(j == 0)
    def _():
        sel_ref[...] = jnp.zeros_like(sel_ref)

    lp = lp_ref[...]                              # [B, WD, VT]
    tgt = tgt_ref[0, :, :]                        # [B, WD]
    vt = lp.shape[-1]

    # Lane-only iota: global vocab id of each lane of this vocab tile.  The -1 sentinel
    # (PAD targets / padded windows) never matches any lane, so a single compare
    # implements both the one-hot gather and ignore_index.
    vocab_ids = jax.lax.broadcasted_iota(jnp.int32, (1, 1, vt), 2) + j * v_tile
    mask = vocab_ids == tgt[:, :, None]                                    # [B, WD, VT]
    # Per-tile reduce in the input dtype: exact because the mask is one-hot
    # (<= 1 nonzero per row per tile).  Cross-tile accumulation happens in f32.
    sel = jnp.sum(jnp.where(mask, lp, jnp.zeros((), lp.dtype)), axis=-1)   # [B, WD]
    sel_ref[0, :, :] = sel_ref[0, :, :] + sel.astype(jnp.float32)


def context_lm_loss(logprobs_blv, X, context_sz, *, block_bytes=None, v_tile_cap=8192):
    """ContextLMLoss.forward with vocab-last log-probs.

    logprobs_blv: [B, L, V] log-probabilities (vocab on the last axis), any float dtype
    X:            [B, T]    int targets in [0, V), PAD (=0) ignored
    context_sz:   D
    """
    D = int(context_sz)
    B, L, V = logprobs_blv.shape
    T = X.shape[1]
    NT = T - D + 1
    assert NT >= 1 and L >= NT * D, "logprobs too short for given T / context_sz"

    X = X.astype(jnp.int32)
    itemsize = np.dtype(logprobs_blv.dtype).itemsize
    sub = _SUBLANE.get(itemsize, 8)
    if block_bytes is None:
        block_bytes = _default_block_bytes()

    # ---- tile sizing --------------------------------------------------------
    # Vocab tile first: as wide as the block budget allows (long contiguous HBM rows,
    # few vocab grid steps); multiple of 128 lanes unless it covers the full vocab.
    w_min = sub // math.gcd(D, sub)                      # minimum legal W granularity
    vt_budget = max(128, block_bytes // max(1, B * w_min * D * itemsize))
    if V <= v_tile_cap and V <= vt_budget:
        VT = V
    else:
        cap128 = max(128, (v_tile_cap // 128) * 128)
        VT = min(cap128, max(128, (vt_budget // 128) * 128))
    GV = pl.cdiv(V, VT)

    # Windows fused per grid step with the remaining budget.  Prefer W*D a multiple of
    # 128 (lane-dense sel stores) when it neither blows the budget nor collapses the
    # parallel window axis; always respect the dtype's sublane unit.
    w_lane = 128 // math.gcd(D, 128)
    w_raw = max(1, block_bytes // max(1, B * D * VT * itemsize))
    w_unit = w_lane if (w_raw >= w_lane and NT > w_lane) else w_min
    W = max(w_unit, (w_raw // w_unit) * w_unit)
    nt_units = pl.cdiv(NT, w_unit)
    if nt_units >= 2:
        # Keep >= 2 window grid steps: v7x has 2 TensorCores and only the "parallel"
        # window axis can shard across them.
        W = min(W, w_unit * ((nt_units + 1) // 2))
    W = min(W, w_unit * nt_units)                        # don't exceed padded window count
    G = pl.cdiv(NT, W)
    NT_pad = G * W

    # ---- tiny host-side prep (O(B*NT*D) int32, negligible vs. logprobs) -----
    t_ids = jnp.arange(NT_pad)                                    # padded window ids
    pos = t_ids[:, None] + jnp.arange(D)[None, :]                 # [NT_pad, D] index into T
    valid_w = t_ids < NT
    pos = jnp.where(valid_w[:, None], pos, 0)
    tg = X[:, pos]                                                # [B, NT_pad, D]
    # -1 sentinel: PAD targets and padded windows never match any vocab lane id,
    # so the kernel needs no separate `!= PAD` compare.
    tg = jnp.where((tg == PAD) | (~valid_w)[None, :, None], -1, tg)
    tgt_pos = (tg.reshape(B, G, W, D)
                 .transpose(1, 0, 2, 3)
                 .reshape(G, B, W * D)
                 .astype(jnp.int32))                              # [G, B, W*D]

    kernel = functools.partial(_ctx_lm_gather_kernel, v_tile=VT)

    sel = pl.pallas_call(
        kernel,
        out_shape=jax.ShapeDtypeStruct((G, B, W * D), jnp.float32),
        grid_spec=pltpu.PrefetchScalarGridSpec(
            num_scalar_prefetch=0,
            grid=(G, GV),
            in_specs=[
                pl.BlockSpec((1, B, W * D), lambda i, j: (i, 0, 0)),   # targets (resident per i)
                pl.BlockSpec((B, W * D, VT), lambda i, j: (0, i, j)),  # log-prob stream
            ],
            out_specs=pl.BlockSpec((1, B, W * D), lambda i, j: (i, 0, 0)),
        ),
        compiler_params=pltpu.CompilerParams(
            dimension_semantics=("parallel", "arbitrary"),  # windows parallel, vocab reduce
        ),
    )(tgt_pos, logprobs_blv)

    # ---- tiny epilogue in plain JAX -----------------------------------------
    s = jnp.sum(sel.reshape(G, B, W, D), axis=(1, 3)).reshape(NT_pad)[:NT]     # [NT]
    win_idx = jnp.arange(NT)[:, None] + jnp.arange(D)[None, :]
    cnt = jnp.sum(X[:, win_idx] != PAD, axis=(0, 2)).astype(jnp.float32)       # [NT]
    # NOTE: all-PAD window -> cnt==0 -> NaN, matching torch nll_loss(reduction='mean').
    return jnp.mean(-(s / cnt))


def context_lm_loss_torch_layout(logprobs_bvl, X, context_sz, **kw):
    """Compat shim for the torch layout [B, V, L] (class dim = 1).

    Prefer emitting vocab-last [B, L, V] upstream (log_softmax over the last axis);
    this transpose is a full-array HBM round trip the kernel itself does not need.
    """
    return context_lm_loss(jnp.transpose(logprobs_bvl, (0, 2, 1)), X, context_sz, **kw)


def _reference_loss(logprobs_blv, X, D):
    """Pure-JAX mirror of the torch loop (on vocab-last layout)."""
    T = X.shape[1]
    losses = []
    for t in range(T - D + 1):
        pred = logprobs_blv[:, t * D:(t + 1) * D, :]              # [B, D, V]
        tgt = X[:, t:t + D]                                       # [B, D]
        sel = jnp.take_along_axis(pred, tgt[:, :, None].astype(jnp.int32), axis=2)[..., 0]
        sel = sel.astype(jnp.float32)
        valid = tgt != PAD
        l = -jnp.sum(jnp.where(valid, sel, 0.0)) / jnp.sum(valid).astype(jnp.float32)
        losses.append(l)
    return sum(losses) / len(losses)


# TODO(synk): the per-window self.logger.debug(...) calls and the accuracy() helper of the
# torch module are not part of the loss value and are not reproduced in-kernel.

if __name__ == "__main__":
    key = jax.random.PRNGKey(0)

    # --- test 1: f32, full vocab in one tile, window axis split over >=2 grid steps ----
    B, V, D, T = 2, 128, 8, 16
    L = D * T
    k1, k2, k3, k4 = jax.random.split(key, 4)
    logits = jax.random.normal(k1, (B, L, V), dtype=jnp.float32)
    logprobs = jax.nn.log_softmax(logits, axis=-1)                # vocab-last layout
    X = jax.random.randint(k2, (B, T), 0, V, dtype=jnp.int32)
    X = X.at[0, 3].set(PAD)                                       # exercise ignore_index

    loss = jax.block_until_ready(context_lm_loss(logprobs, X, D))
    ref = jax.block_until_ready(_reference_loss(logprobs, X, D))
    np.testing.assert_allclose(np.asarray(loss), np.asarray(ref), rtol=1e-5, atol=1e-5)

    # torch-layout compat shim gives the same value
    loss_t = jax.block_until_ready(
        context_lm_loss_torch_layout(jnp.transpose(logprobs, (0, 2, 1)), X, D))
    np.testing.assert_allclose(np.asarray(loss_t), np.asarray(ref), rtol=1e-5, atol=1e-5)

    # --- test 2: vocab tiling (partial tail tile) + multi-step window grid --------------
    V2 = 500
    logits2 = jax.random.normal(k3, (B, L, V2), dtype=jnp.float32)
    logprobs2 = jax.nn.log_softmax(logits2, axis=-1)
    X2 = jax.random.randint(k4, (B, T), 0, V2, dtype=jnp.int32)
    X2 = X2.at[1, 7].set(PAD)

    loss2 = jax.block_until_ready(
        context_lm_loss(logprobs2, X2, D, block_bytes=32768, v_tile_cap=128))
    ref2 = jax.block_until_ready(_reference_loss(logprobs2, X2, D))
    np.testing.assert_allclose(np.asarray(loss2), np.asarray(ref2), rtol=1e-5, atol=1e-5)

    # --- test 3: bf16 log-probs (16-sublane packing path), generation-default blocks ----
    logprobs3 = logprobs.astype(jnp.bfloat16)
    loss3 = jax.block_until_ready(context_lm_loss(logprobs3, X, D))
    ref3 = jax.block_until_ready(_reference_loss(logprobs3, X, D))
    np.testing.assert_allclose(np.asarray(loss3), np.asarray(ref3), rtol=1e-5, atol=1e-5)

    print("KERNEL_OK")
</pallas_src>

<mosaic_0001>
module attributes {stable_mosaic.version = 11 : i64} {
  func.func @_ctx_lm_gather_kernel(%arg0: i32, %arg1: i32, %arg2: memref<1x2x40xi32, #tpu.memory_space<vmem>>, %arg3: memref<2x40x128xf32, #tpu.memory_space<vmem>>, %arg4: memref<1x2x40xf32, #tpu.memory_space<vmem>>) attributes {dimension_semantics = [#tpu.dimension_semantics<parallel>, #tpu.dimension_semantics<arbitrary>], iteration_bounds = array<i64: 2, 1>, scalar_prefetch = 0 : i64, scratch_operands = 0 : i64, tpu.core_type = #tpu.core_type<tc>, window_params = [{transform_indices = @transform_0, window_bounds = array<i64: 1, 2, 40>}, {transform_indices = @transform_1, window_bounds = array<i64: 2, 40, 128>}, {transform_indices = @transform_2, window_bounds = array<i64: 1, 2, 40>}]} {
    %c0_i32 = arith.constant 0 : i32
    %0 = arith.cmpi eq, %arg1, %c0_i32 : i32
    %1 = arith.extui %0 : i1 to i32
    %c0_i32_0 = arith.constant 0 : i32
    %2 = arith.cmpi ne, %1, %c0_i32_0 : i32
    scf.if %2 {
      %cst_13 = arith.constant 0.000000e+00 : f32
      %23 = vector.broadcast %cst_13 : f32 to vector<1x2x40xf32>
      %c0_14 = arith.constant 0 : index
      %c0_15 = arith.constant 0 : index
      %c0_16 = arith.constant 0 : index
      %24 = vector.load %arg4[%c0_14, %c0_15, %c0_16] : memref<1x2x40xf32, #tpu.memory_space<vmem>>, vector<1x2x40xf32>
      tpu.vector_store %arg4[%c0_14, %c0_15, %c0_16], %23 {strides = array<i32>} : memref<1x2x40xf32, #tpu.memory_space<vmem>>, vector<1x2x40xf32>,
    } else {
    }
    %c0 = arith.constant 0 : index
    %c0_1 = arith.constant 0 : index
    %c0_2 = arith.constant 0 : index
    %3 = vector.load %arg3[%c0, %c0_1, %c0_2] : memref<2x40x128xf32, #tpu.memory_space<vmem>>, vector<2x40x128xf32>
    %c0_3 = arith.constant 0 : index
    %c0_4 = arith.constant 0 : index
    %c0_5 = arith.constant 0 : index
    %4 = vector.load %arg2[%c0_3, %c0_4, %c0_5] : memref<1x2x40xi32, #tpu.memory_space<vmem>>, vector<1x2x40xi32>
    %5 = vector.shape_cast %4 : vector<1x2x40xi32> to vector<2x40xi32>
    %6 = tpu.iota {dimensions = array<i32: 2>} : vector<1x1x128xi32>
    %c128_i32 = arith.constant 128 : i32
    %7 = arith.muli %arg1, %c128_i32 : i32
    %8 = vector.broadcast %7 : i32 to vector<1x1x128xi32>
    %9 = arith.addi %6, %8 : vector<1x1x128xi32>
    %10 = vector.shape_cast %5 : vector<2x40xi32> to vector<2x40x1xi32>
    %11 = vector.broadcast %9 : vector<1x1x128xi32> to vector<2x40x128xi32>
    %12 = vector.broadcast %10 : vector<2x40x1xi32> to vector<2x40x128xi32>
    %13 = arith.cmpi eq, %11, %12 : vector<2x40x128xi32>
    %cst = arith.constant 0.000000e+00 : f32
    %14 = vector.broadcast %cst : f32 to vector<2x40x128xf32>
    %15 = arith.select %13, %3, %14 : vector<2x40x128xi1>, vector<2x40x128xf32>
    %cst_6 = arith.constant dense<0.000000e+00> : vector<2x40xf32>
    %16 = vector.multi_reduction <add>, %15, %cst_6 [2] : vector<2x40x128xf32> to vector<2x40xf32>
    %c0_7 = arith.constant 0 : index
    %c0_8 = arith.constant 0 : index
    %c0_9 = arith.constant 0 : index
    %17 = vector.load %arg4[%c0_7, %c0_8, %c0_9] : memref<1x2x40xf32, #tpu.memory_space<vmem>>, vector<1x2x40xf32>
    %18 = vector.shape_cast %17 : vector<1x2x40xf32> to vector<2x40xf32>
    %19 = arith.addf %18, %16 : vector<2x40xf32>
    %c0_10 = arith.constant 0 : index
    %c0_11 = arith.constant 0 : index
    %c0_12 = arith.constant 0 : index
    %20 = vector.load %arg4[%c0_10, %c0_11, %c0_12] : memref<1x2x40xf32, #tpu.memory_space<vmem>>, vector<1x2x40xf32>
    %21 = vector.shape_cast %20 : vector<1x2x40xf32> to vector<2x40xf32>
    %22 = vector.shape_cast %19 : vector<2x40xf32> to vector<1x2x40xf32>
    tpu.vector_store %arg4[%c0_10, %c0_11, %c0_12], %22 {strides = array<i32>} : memref<1x2x40xf32, #tpu.memory_space<vmem>>, vector<1x2x40xf32>,
    return
  }
  func.func @transform_0(%arg0: i32, %arg1: i32) -> (i32, i32, i32) {
    %c0_i32 = arith.constant 0 : i32
    %c0_i32_0 = arith.constant 0 : i32
    %c0_i32_1 = arith.constant 0 : i32
    return %arg0, %c0_i32, %c0_i32_0 : i32, i32, i32
  }
  func.func @transform_1(%arg0: i32, %arg1: i32) -> (i32, i32, i32) {
    %c0_i32 = arith.constant 0 : i32
    %c0_i32_0 = arith.constant 0 : i32
    return %c0_i32, %arg0, %arg1 : i32, i32, i32
  }
  func.func @transform_2(%arg0: i32, %arg1: i32) -> (i32, i32, i32) {
    %c0_i32 = arith.constant 0 : i32
    %c0_i32_0 = arith.constant 0 : i32
    %c0_i32_1 = arith.constant 0 : i32
    return %arg0, %c0_i32, %c0_i32_0 : i32, i32, i32
  }
}

</mosaic_0001>

<llo_original>
// kernel: tpu_custom_call.1
$region0: #{tpu_custom_call.1}
  #allocation0 [shape = 'u32[]', space=smem, size = 0x4, offset = 0x4, fixed_abs, tag = 'smem constant byte address 0x4 - core index']
  #allocation1 [shape = 'u32[144,128]{1,0:T(1,128)}', space=vmem, size = 0x12000, scoped, tag = 'internal scratch']
  #allocation8 [shape = 's32[]', space=sflag, size = 0x4, offset = 0, fixed_abs, tag = 'sflag constant byte address 0x0 - dummy sync flag']
  %s0 = inlined_call_operand.hbm [shape: s32[2,2,40], index: 0, kind: input, shape index: {}]
  %s1 = inlined_call_operand.hbm [shape: f32[2,128,128], index: 1, kind: input, shape index: {}]
  %s2 = inlined_call_operand.hbm [shape: f32[2,2,40], index: 2, kind: output, shape index: {}]
  %s3 = sld [smem:[#allocation0]]
  $region53: #{tpu_custom_call.1} parent=0
    _
  %s5 = ssub.s32 1, %s3
  %s6 = scalar_select 0, %s5, %s3
  $region1: #{tpu_custom_call.1} parent=0
    #allocation2 [shape = 'u8[2048]{0}', space=vmem, size = 0x800, scoped, tag = 'input window, operand 0']
    #allocation3 [shape = 's32[2]{0}', space=sflag, size = 0x8, scoped, tag = 'scoped memory for tpu_custom_call.1']
    #allocation4 [shape = 's32[2]{0}', space=sflag, size = 0x8, scoped, tag = 'scoped memory for tpu_custom_call.1']
    #allocation5 [shape = 'u8[81920]{0}', space=vmem, size = 0x14000, scoped, tag = 'input window, operand 1']
    #allocation6 [shape = 's32[2]{0}', space=sflag, size = 0x8, scoped, tag = 'scoped memory for tpu_custom_call.1']
    #allocation7 [shape = 'u8[2048]{0}', space=vmem, size = 0x800, scoped, tag = 'output window, operand 0']
    %7 = vsyncpa [#allocation3], 0
    %s8 = scalar_lea.sflag [#allocation3], 1
    %9 = vsyncpa %s8, 0
    %10 = vsyncpa [#allocation6], 0
    %s11 = scalar_lea.sflag [#allocation6], 1
    %12 = vsyncpa %s11, 0
    %13 = vsyncpa [#allocation4], 0
    %s14 = scalar_lea.sflag [#allocation4], 1
    %15 = vsyncpa %s14, 0
    loop: start=0, step=1, limit=4
    $region2: #{tpu_custom_call.1} parent=1 // loop_pre_header
      _
    $region3: #{tpu_custom_call.1} parent=1 // loop_header
      %s17 = sphi 0, %s21
      %p18 = scmp.ge.s32.totalorder %s17, 4
      %s24 = sphi 0, %s36
      %s25 = sphi 0, %s32
      %s26 = sphi 0, %s24
      %s27 = sphi 0, %s25
      %s28 = sphi 0, %s26
      %s29 = sphi 0, %s27
      %s39 = sphi 0, %s41
      %s42 = sphi 0, %s39
      %s43 = sphi 0, %s42
      %s59 = sphi 0, %s43
      %s67 = sphi 0, %s69
      %s70 = sphi 0, %s67
      %s71 = sphi 0, %s70
      %s87 = sphi 0, %s71
      %s93 = sphi 0, %s95
      %s96 = sphi 0, %s93
      %s97 = sphi 0, %s96
      %s113 = sphi 0, %s97
    $region4: #{tpu_custom_call.1} parent=1 // loop_header_branch
      %20 = sbr.rel (%p18) target = $region8
    $region5: #{tpu_custom_call.1} parent=1 // loop_body
      %s22 = ssub.s32 %s17, 1
      %s23 = ssub.s32 %s17, 2
      %s30 = sadd.s32 1, %s25
      %p31 = scmp.ge.s32.totalorder %s30, 1
      %s32 = scalar_select %p31, 0, %s30
      %s33 = sadd.s32 1, %s24
      %s34 = scalar_select %p31, %s33, %s24
      %p35 = scmp.ge.s32.totalorder %s34, 2
      %s36 = scalar_select %p35, 0, %s34
      %s37 = ssub.s32 %s24, %s36
      %p38 = scmp.eq.s32.totalorder %s37, 0
      %s40 = sadd.s32 %s39, 1
      %s41 = scalar_select %p38, %s39, %s40
      %p44 = pneg %p38
      %p45 = scmp.eq.s32.totalorder %s17, 1
      %p46 = por %p44, %p45
      %p47 = scmp.ne.s32.totalorder %s39, %s42
      %p48 = scmp.eq.s32.totalorder %s17, 0
      %p49 = por %p47, %p48
      %p50 = scmp.ne.s32.totalorder %s39, %s42
      %p51 = scmp.eq.s32.totalorder %s22, 1
      %p52 = por %p50, %p51
      %p53 = scmp.ne.s32.totalorder %s42, %s43
      %p54 = scmp.eq.s32.totalorder %s22, 0
      %p55 = por %p53, %p54
      %p56 = scmp.ne.s32.totalorder %s42, %s43
      %p57 = scmp.eq.s32.totalorder %s23, 1
      %p58 = por %p56, %p57
      %p60 = scmp.ne.s32.totalorder %s43, %s59
      %p61 = scmp.eq.s32.totalorder %s23, 0
      %p62 = por %p60, %p61
      %s63 = ssub.s32 %s24, %s36
      %s64 = ssub.s32 %s25, %s32
      %s65 = sor.u32 %s63, %s64
      %p66 = scmp.eq.s32.totalorder %s65, 0
      %s68 = sadd.s32 %s67, 1
      %s69 = scalar_select %p66, %s67, %s68
      %p72 = pneg %p66
      %p73 = scmp.eq.s32.totalorder %s17, 1
      %p74 = por %p72, %p73
      %p75 = scmp.ne.s32.totalorder %s67, %s70
      %p76 = scmp.eq.s32.totalorder %s17, 0
      %p77 = por %p75, %p76
      %p78 = scmp.ne.s32.totalorder %s67, %s70
      %p79 = scmp.eq.s32.totalorder %s22, 1
      %p80 = por %p78, %p79
      %p81 = scmp.ne.s32.totalorder %s70, %s71
      %p82 = scmp.eq.s32.totalorder %s22, 0
      %p83 = por %p81, %p82
      %p84 = scmp.ne.s32.totalorder %s70, %s71
      %p85 = scmp.eq.s32.totalorder %s23, 1
      %p86 = por %p84, %p85
      %p88 = scmp.ne.s32.totalorder %s71, %s87
      %p89 = scmp.eq.s32.totalorder %s23, 0
      %p90 = por %p88, %p89
      %s91 = ssub.s32 %s24, %s36
      %p92 = scmp.eq.s32.totalorder %s91, 0
      %s94 = sadd.s32 %s93, 1
      %s95 = scalar_select %p92, %s93, %s94
      %p98 = pneg %p92
      %p99 = scmp.eq.s32.totalorder %s17, 1
      %p100 = por %p98, %p99
      %p101 = scmp.ne.s32.totalorder %s93, %s96
      %p102 = scmp.eq.s32.totalorder %s17, 0
      %p103 = por %p101, %p102
      %p104 = scmp.ne.s32.totalorder %s93, %s96
      %p105 = scmp.eq.s32.totalorder %s22, 1
      %p106 = por %p104, %p105
      %p107 = scmp.ne.s32.totalorder %s96, %s97
      %p108 = scmp.eq.s32.totalorder %s22, 0
      %p109 = por %p107, %p108
      %p110 = scmp.ne.s32.totalorder %s96, %s97
      %p111 = scmp.eq.s32.totalorder %s23, 1
      %p112 = por %p110, %p111
      %p114 = scmp.ne.s32.totalorder %s97, %s113
      %p115 = scmp.eq.s32.totalorder %s23, 0
      %p116 = por %p114, %p115
      %p117 = scmp.le.s32.totalorder 1, %s17
      %p118 = scmp.lt.s32.totalorder %s17, 3
      %p119 = pnand %p117, %p118
      %p120 = pneg %p119
      // Predicated region
      $region9: #{tpu_custom_call.1} parent=5 // pred_check
        _
      $region10: #{tpu_custom_call.1} parent=5 // pred_check_branch
        %122 = sbr.rel (%p119) target = $region12
      $region11: #{tpu_custom_call.1} parent=5 // pred_region
        %s123 = ssub.s32 %s17, 1
      $region12: #{tpu_custom_call.1} parent=5 // pred_fallthru
        _
      %p124 = scmp.lt.s32.totalorder %s17, 2
      // Predicated region
      $region13: #{tpu_custom_call.1} parent=5 // pred_check
        %p125 = pneg %p124
      $region14: #{tpu_custom_call.1} parent=5 // pred_check_branch
        %127 = sbr.rel (%p125) target = $region16
      $region15: #{tpu_custom_call.1} parent=5 // pred_region
        // Predicated region
        $region17: #{tpu_custom_call.1} parent=15 // pred_check
          %p128 = pneg %p49
        $region18: #{tpu_custom_call.1} parent=15 // pred_check_branch
          %130 = sbr.rel (%p128) target = $region20
        $region19: #{tpu_custom_call.1} parent=15 // pred_region
          %s131 = sand.u32 %s39, 1
          %s132 = scalar_lea.sflag [#allocation3], %s131
          %s133 = sand.u32 %s39, 1
          %s134 = smul.addr %s133, 2
          %s135 = scalar_lea.vmem [#allocation2], %s134
          %s137 = ssub.s32 32, 32
          %138 = vsyncadd %s132, %s137
          %s139 = smul.addr %s24, 32
          %s140 = scalar_lea.hbm %s0, %s139
          %s142 = sshll.u32 %s135, 4
          %s143 = int_to_ptr.vmem [resolvable:$true] %s142
          %145 = dma.hbm_to_vmem [thread:$0]  %s140, 32, %s143, %s132
        $region20: #{tpu_custom_call.1} parent=15 // pred_fallthru
          _
        // Predicated region
        $region21: #{tpu_custom_call.1} parent=15 // pred_check
          %p146 = pneg %p77
        $region22: #{tpu_custom_call.1} parent=15 // pred_check_branch
          %148 = sbr.rel (%p146) target = $region24
        $region23: #{tpu_custom_call.1} parent=15 // pred_region
          #allocation9 [shape = 'u32[6]{0}', space=smem, size = 0x18, scoped, tag = 'DMA stride descriptor']
          %s149 = sand.u32 %s67, 1
          %s150 = scalar_lea.sflag [#allocation6], %s149
          %s151 = sand.u32 %s67, 1
          %s152 = smul.addr %s151, 80
          %s153 = scalar_lea.vmem [#allocation5], %s152
          %s154 = smul.u32 5, %s24
          %s155 = ssub.s32 16, %s154
          %p156 = scmp.lt.s32.totalorder %s155, 5
          %s157 = scalar_select %p156, %s155, 5
          %s158 = smul.u32 256, %s157
          %s160 = ssub.s32 1280, %s158
          %161 = vsyncadd %s150, %s160
          %p162 = scmp.ne.s32.totalorder 0, %s158
          %s163 = sadd.s32 %s25, %s154
          %s164 = smul.addr %s163, 128
          %s165 = scalar_lea.hbm %s1, %s164
          %s166 = smul.u32 8, %s157
          %s167 = smul.u32 %s166, 2
          %s169 = sshll.u32 1, 14
          %s170 = sxor.u32 4294967295, %s169
          %s172 = sld [smem:[#allocation0]]
          %s173 = sadd.s32 2, %s172
          %s175 = sshll.u32 7, 26
          %s176 = sxor.u32 4294967295, %s175
          %s177 = sand.u32 0, %s176
          %s178 = sshll.u32 %s173, 26
          %s179 = sor.u32 %s177, %s178
          %s180 = sshll.u32 %s153, 4
          %s181 = int_to_ptr.vmem [resolvable:$true] %s180
          %s182 = sshll.u32 %s167, 4
          %187 = sst [smem:[#allocation9]] 2048
          %s188 = scalar_lea.smem [#allocation9], 1
          %189 = sst [smem:[%s188]] 640
          %s190 = scalar_lea.smem [#allocation9], 2
          %191 = sst [smem:[%s190]] %s157
          %s192 = scalar_lea.smem [#allocation9], 3
          %193 = sst [smem:[%s192]] 128
          %s194 = scalar_lea.smem [#allocation9], 4
          %195 = sst [smem:[%s194]] 128
          %s196 = scalar_lea.smem [#allocation9], 5
          %197 = sst [smem:[%s196]] 8
          %199 = dma.general (%p162), %s165, %s182, %s181, %s150, 131072, [#allocation9], %s179, 0
        $region24: #{tpu_custom_call.1} parent=15 // pred_fallthru
          _
      $region16: #{tpu_custom_call.1} parent=5 // pred_fallthru
        _
      %p200 = scmp.le.s32.totalorder 1, %s17
      %p201 = scmp.lt.s32.totalorder %s17, 3
      %p202 = pnand %p200, %p201
      %p203 = pneg %p202
      // Predicated region
      $region25: #{tpu_custom_call.1} parent=5 // pred_check
        _
      $region26: #{tpu_custom_call.1} parent=5 // pred_check_branch
        %205 = sbr.rel (%p202) target = $region28
      $region27: #{tpu_custom_call.1} parent=5 // pred_region
        %s206 = ssub.s32 %s17, 1
        %s207 = sand.u32 %s42, 1
        %s208 = scalar_lea.sflag [#allocation3], %s207
        %s209 = sand.u32 %s42, 1
        %s210 = smul.addr %s209, 2
        %s211 = scalar_lea.vmem [#allocation2], %s210
        // Predicated region
        $region29: #{tpu_custom_call.1} parent=27 // pred_check
          %p212 = pneg %p55
        $region30: #{tpu_custom_call.1} parent=27 // pred_check_branch
          %214 = sbr.rel (%p212) target = $region32
        $region31: #{tpu_custom_call.1} parent=27 // pred_region
          %215 = dma.done %s208, 32
        $region32: #{tpu_custom_call.1} parent=27 // pred_fallthru
          _
        %s216 = sand.u32 %s70, 1
        %s217 = scalar_lea.sflag [#allocation6], %s216
        %s218 = sand.u32 %s70, 1
        %s219 = smul.addr %s218, 80
        %s220 = scalar_lea.vmem [#allocation5], %s219
        // Predicated region
        $region33: #{tpu_custom_call.1} parent=27 // pred_check
          %p221 = pneg %p83
        $region34: #{tpu_custom_call.1} parent=27 // pred_check_branch
          %223 = sbr.rel (%p221) target = $region36
        $region35: #{tpu_custom_call.1} parent=27 // pred_region
          %224 = dma.done %s217, 1280
        $region36: #{tpu_custom_call.1} parent=27 // pred_fallthru
          _
        %s225 = sand.u32 %s42, 1
        %s226 = scalar_lea.sflag [#allocation3], %s225
        %s227 = sand.u32 %s42, 1
        %s228 = smul.addr %s227, 2
        %s229 = scalar_lea.vmem [#allocation2], %s228
        %p230 = pneg %p55
        %p231 = pneg %p52
        %s232 = sand.u32 %s70, 1
        %s233 = scalar_lea.sflag [#allocation6], %s232
        %s234 = sand.u32 %s70, 1
        %s235 = smul.addr %s234, 80
        %s236 = scalar_lea.vmem [#allocation5], %s235
        %p237 = pneg %p83
        %p238 = pneg %p80
        %p239 = pneg %p109
        %p240 = pneg %p106
        %s241 = sand.u32 %s96, 1
        %s242 = scalar_lea.sflag [#allocation4], %s241
        %s243 = sand.u32 %s96, 1
        %s244 = smul.addr %s243, 2
        %s245 = scalar_lea.vmem [#allocation7], %s244
        %s246 = smul.u32 5, %s26
        %s247 = ssub.s32 16, %s246
        %p248 = scmp.lt.s32.totalorder %s247, 5
        %s249 = scalar_select %p248, %s247, 5
        %s250 = smul.u32 256, %s249
        %p251 = scmp.eq.s32.totalorder %s27, 0
        // Predicated region
        $region37: #{tpu_custom_call.1} parent=27 // pred_check
          %p252 = pneg %p251
        $region38: #{tpu_custom_call.1} parent=27 // pred_check_branch
          %254 = sbr.rel (%p252) target = $region40
        $region39: #{tpu_custom_call.1} parent=27 // pred_region
          %vm255 = vcmask 320512
          %256 = vst.msk [vmem:[%s245] sm:$0x3] %vm255, 0.0
        $region40: #{tpu_custom_call.1} parent=27 // pred_fallthru
          _
        %v257 = vld [vmem:[%s220] sm:$0xff]
        %v258 = vld [vmem:[%s220 + $0x8] sm:$0xff]
        %v259 = vld [vmem:[%s220 + $0x10] sm:$0xff]
        %v260 = vld [vmem:[%s220 + $0x18] sm:$0xff]
        %v261 = vld [vmem:[%s220 + $0x20] sm:$0xff]
        %v262 = vld [vmem:[%s220 + $0x28] sm:$0xff]
        %v263 = vld [vmem:[%s220 + $0x30] sm:$0xff]
        %v264 = vld [vmem:[%s220 + $0x38] sm:$0xff]
        %v265 = vld [vmem:[%s220 + $0x40] sm:$0xff]
        %v266 = vld [vmem:[%s220 + $0x48] sm:$0xff]
        %v267 = vld [vmem:[%s211] sm:$0x3]
        %v268 = vlaneseq
        %v269 = vand.u32 %v268, 127
        %s270 = smul.u32 %s27, 128
        %v271 = vstv %s270
        %v272 = vadd.s32 %v269, %v271
        %v273 = vlaneseq
        %v274 = vshrl.u32 %v273, 7
        %v275 = vsub.s32 0, %v274
        %v276 = vrot.slane %v267, %v275
        %278 = vbcast.lane.b32.xlu0 %v276, 256
        %v279 = vpop.permute.xlu0 %278
        %s281 = sor.u32 256, 8
        %282 = vbcast.lane.b32.xlu0 %v276, %s281
        %v283 = vpop.permute.xlu0 %282
        %s285 = sor.u32 256, 16
        %286 = vbcast.lane.b32.xlu0 %v276, %s285
        %v287 = vpop.permute.xlu0 %286
        %s289 = sor.u32 256, 24
        %290 = vbcast.lane.b32.xlu0 %v276, %s289
        %v291 = vpop.permute.xlu0 %290
        %s293 = sor.u32 256, 32
        %294 = vbcast.lane.b32.xlu0 %v276, %s293
        %v295 = vpop.permute.xlu0 %294
        %v296 = vlaneseq
        %v297 = vshrl.u32 %v296, 7
        %v298 = vsub.s32 1, %v297
        %v299 = vrot.slane %v267, %v298
        %301 = vbcast.lane.b32.xlu0 %v299, 256
        %v302 = vpop.permute.xlu0 %301
        %s304 = sor.u32 256, 8
        %305 = vbcast.lane.b32.xlu0 %v299, %s304
        %v306 = vpop.permute.xlu0 %305
        %s308 = sor.u32 256, 16
        %309 = vbcast.lane.b32.xlu0 %v299, %s308
        %v310 = vpop.permute.xlu0 %309
        %s312 = sor.u32 256, 24
        %313 = vbcast.lane.b32.xlu0 %v299, %s312
        %v314 = vpop.permute.xlu0 %313
        %s316 = sor.u32 256, 32
        %317 = vbcast.lane.b32.xlu0 %v299, %s316
        %v318 = vpop.permute.xlu0 %317
        %vm319 = vcmp.eq.s32.totalorder %v272, %v279
        %vm320 = vcmp.eq.s32.totalorder %v272, %v283
        %vm321 = vcmp.eq.s32.totalorder %v272, %v287
        %vm322 = vcmp.eq.s32.totalorder %v272, %v291
        %vm323 = vcmp.eq.s32.totalorder %v272, %v295
        %vm324 = vcmp.eq.s32.totalorder %v272, %v302
        %vm325 = vcmp.eq.s32.totalorder %v272, %v306
        %vm326 = vcmp.eq.s32.totalorder %v272, %v310
        %vm327 = vcmp.eq.s32.totalorder %v272, %v314
        %vm328 = vcmp.eq.s32.totalorder %v272, %v318
        %v329 = vsel %vm319, %v257, 0.0
        %v330 = vsel %vm320, %v258, 0.0
        %v331 = vsel %vm321, %v259, 0.0
        %v332 = vsel %vm322, %v260, 0.0
        %v333 = vsel %vm323, %v261, 0.0
        %v334 = vsel %vm324, %v262, 0.0
        %v335 = vsel %vm325, %v263, 0.0
        %v336 = vsel %vm326, %v264, 0.0
        %v337 = vsel %vm327, %v265, 0.0
        %v338 = vsel %vm328, %v266, 0.0
        %339 = vadd.xlane.f32.xlu0 %v329
        %v340 = vpop.xlane.xlu0 %339
        %341 = vadd.xlane.f32.xlu0 %v330
        %v342 = vpop.xlane.xlu0 %341
        %343 = vadd.xlane.f32.xlu0 %v331
        %v344 = vpop.xlane.xlu0 %343
        %345 = vadd.xlane.f32.xlu0 %v332
        %v346 = vpop.xlane.xlu0 %345
        %347 = vadd.xlane.f32.xlu0 %v333
        %v348 = vpop.xlane.xlu0 %347
        %349 = vadd.xlane.f32.xlu0 %v334
        %v350 = vpop.xlane.xlu0 %349
        %351 = vadd.xlane.f32.xlu0 %v335
        %v352 = vpop.xlane.xlu0 %351
        %353 = vadd.xlane.f32.xlu0 %v336
        %v354 = vpop.xlane.xlu0 %353
        %355 = vadd.xlane.f32.xlu0 %v337
        %v356 = vpop.xlane.xlu0 %355
        %357 = vadd.xlane.f32.xlu0 %v338
        %v358 = vpop.xlane.xlu0 %357
        %v359 = vld [vmem:[%s245] sm:$0x3]
        %v370 = vlaneseq
        %v371 = vshrl.u32 %v370, 7
        %v372 = vsub.s32 %v269, %v371
        %v373 = vrot.slane %v340, %v372
        %v374 = vadd.s32 %v269, 4294967288
        %v375 = vlaneseq
        %v376 = vshrl.u32 %v375, 7
        %v377 = vsub.s32 %v374, %v376
        %v378 = vrot.slane %v342, %v377
        %vm379 = vcmask 130112
        %v380 = vsel %vm379, %v378, %v373
        %v381 = vadd.s32 %v269, 4294967280
        %v382 = vlaneseq
        %v383 = vshrl.u32 %v382, 7
        %v384 = vsub.s32 %v381, %v383
        %v385 = vrot.slane %v344, %v384
        %vm386 = vcmask 195712
        %v387 = vsel %vm386, %v385, %v380
        %v388 = vadd.s32 %v269, 4294967272
        %v389 = vlaneseq
        %v390 = vshrl.u32 %v389, 7
        %v391 = vsub.s32 %v388, %v390
        %v392 = vrot.slane %v346, %v391
        %vm393 = vcmask 261312
        %v394 = vsel %vm393, %v392, %v387
        %v395 = vadd.s32 %v269, 4294967264
        %v396 = vlaneseq
        %v397 = vshrl.u32 %v396, 7
        %v398 = vsub.s32 %v395, %v397
        %v399 = vrot.slane %v348, %v398
        %vm400 = vcmask 326912
        %v401 = vsel %vm400, %v399, %v394
        %v402 = vlaneseq
        %v403 = vshrl.u32 %v402, 7
        %v404 = vsub.s32 %v269, %v403
        %v405 = vrot.slane %v350, %v404
        %v406 = vlaneseq
        %v407 = vshrl.u32 %v406, 7
        %v408 = vsub.s32 %v374, %v407
        %v409 = vrot.slane %v352, %v408
        %v410 = vsel %vm379, %v409, %v405
        %v411 = vlaneseq
        %v412 = vshrl.u32 %v411, 7
        %v413 = vsub.s32 %v381, %v412
        %v414 = vrot.slane %v354, %v413
        %v415 = vsel %vm386, %v414, %v410
        %v416 = vlaneseq
        %v417 = vshrl.u32 %v416, 7
        %v418 = vsub.s32 %v388, %v417
        %v419 = vrot.slane %v356, %v418
        %v420 = vsel %vm393, %v419, %v415
        %v421 = vlaneseq
        %v422 = vshrl.u32 %v421, 7
        %v423 = vsub.s32 %v395, %v422
        %v424 = vrot.slane %v358, %v423
        %v425 = vsel %vm400, %v424, %v420
        %vm426 = vcmask 1041409
        %v427 = vsel %vm426, %v425, %v401
        %v429 = vadd.f32 %v359, %v427
        %vm430 = vcmask 320512
        %431 = vst.msk [vmem:[%s245] sm:$0x3] %vm430, %v429
        %s432 = sand.u32 %s96, 1
        %s433 = scalar_lea.sflag [#allocation4], %s432
        %s434 = sand.u32 %s96, 1
        %s435 = smul.addr %s434, 2
        %s436 = scalar_lea.vmem [#allocation7], %s435
        // Predicated region
        $region41: #{tpu_custom_call.1} parent=27 // pred_check
          %p437 = pneg %p106
        $region42: #{tpu_custom_call.1} parent=27 // pred_check_branch
          %439 = sbr.rel (%p437) target = $region44
        $region43: #{tpu_custom_call.1} parent=27 // pred_region
          %s441 = ssub.s32 32, 32
          %442 = vsyncadd %s433, %s441
          %s443 = smul.addr %s26, 32
          %s444 = scalar_lea.hbm %s2, %s443
          %s446 = sshll.u32 %s436, 4
          %s447 = int_to_ptr.vmem [resolvable:$true] %s446
          %449 = dma.vmem_to_hbm [thread:$0]  %s447, 32, %s444, %s433
        $region44: #{tpu_custom_call.1} parent=27 // pred_fallthru
          _
      $region28: #{tpu_custom_call.1} parent=5 // pred_fallthru
        _
      %p450 = scmp.le.s32.totalorder 2, %s17
      // Predicated region
      $region45: #{tpu_custom_call.1} parent=5 // pred_check
        %p451 = pneg %p450
      $region46: #{tpu_custom_call.1} parent=5 // pred_check_branch
        %453 = sbr.rel (%p451) target = $region48
      $region47: #{tpu_custom_call.1} parent=5 // pred_region
        %s454 = ssub.s32 %s17, 2
        // Predicated region
        $region49: #{tpu_custom_call.1} parent=47 // pred_check
          %p455 = pneg %p112
        $region50: #{tpu_custom_call.1} parent=47 // pred_check_branch
          %457 = sbr.rel (%p455) target = $region52
        $region51: #{tpu_custom_call.1} parent=47 // pred_region
          %s458 = sand.u32 %s97, 1
          %s459 = scalar_lea.sflag [#allocation4], %s458
          %s460 = sand.u32 %s97, 1
          %s461 = smul.addr %s460, 2
          %s462 = scalar_lea.vmem [#allocation7], %s461
          %463 = dma.done %s459, 32
        $region52: #{tpu_custom_call.1} parent=47 // pred_fallthru
          _
      $region48: #{tpu_custom_call.1} parent=5 // pred_fallthru
        _
    $region6: #{tpu_custom_call.1} parent=1 // loop_footer
      %s21 = sadd.s32 1, %s17
    $region7: #{tpu_custom_call.1} parent=1 // loop_footer_branch
      %16 = sbr.rel target = $region3
    $region8: #{tpu_custom_call.1} parent=1 // loop_exit
      _
    %464 = vsyncpa [#allocation3], 1
    %s465 = scalar_lea.sflag [#allocation3], 1
    %466 = vsyncpa %s465, 1
    %467 = vsyncpa [#allocation6], 1
    %s468 = scalar_lea.sflag [#allocation6], 1
    %469 = vsyncpa %s468, 1
    %470 = vsyncpa [#allocation4], 1
    %s471 = scalar_lea.sflag [#allocation4], 1
    %472 = vsyncpa %s471, 1

</llo_original>
